<compile_context>
chip_gen: v7x
topology: tpu7x:2x2x1
jax: 0.10.0
libtpu: 0.0.40
codegen_flags: <defaults>
</compile_context>

<pallas_src>
import jax
import jax.numpy as jnp
from jax.experimental import pallas as pl
from jax.experimental.pallas import tpu as pltpu

H1_LOGICAL, H2_LOGICAL = 400, 300
H1_PAD, H2_PAD = 512, 384       # lane (128) multiples
D_IN_PAD = 16                   # state_dim + action_dim, padded (bf16 sublane group)


def _critic_kernel(x_ref, w1_ref, b1_ref, w2_ref, b2_ref, w3_ref, b3_ref, o_ref):
    # Layer 1 (MXU, bf16 inputs, f32 accumulate).  x arrives pre-concatenated,
    # pre-cast to bf16 and zero-padded from the wrapper -> no in-kernel casts.
    h1 = jnp.dot(x_ref[...], w1_ref[...],
                 preferred_element_type=jnp.float32) + b1_ref[...]
    h1 = jnp.maximum(h1, 0.0)

    # Layer 2 (MXU, bf16 inputs, f32 accumulate).
    h2 = jnp.dot(h1.astype(jnp.bfloat16), w2_ref[...],
                 preferred_element_type=jnp.float32) + b2_ref[...]
    h2 = jnp.maximum(h2, 0.0)

    # Layer 3 (out_features == 1): VPU multiply + lane reduction instead of an
    # MXU matmul with a single live result lane; b3 is a scalar held in SMEM.
    w3 = w3_ref[...].astype(jnp.float32)            # (1, H2_PAD), pad cols are 0
    q = jnp.sum(h2 * w3, axis=-1, keepdims=True) + b3_ref[0, 0]
    o_ref[...] = q.astype(o_ref.dtype)


def critic_forward(state, action, params):
    """state: [B, state_dim], action: [B, action_dim] -> q: [B, 1] (float32)."""
    w1, b1, w2, b2, w3, b3 = params
    B = state.shape[0]
    d_in = state.shape[1] + action.shape[1]
    assert d_in <= D_IN_PAD

    # Batch block: f32 sublane multiple, capped at 256 rows so intermediates
    # stay small, grid steps pipeline, and v7x can shard them across its 2 TCs.
    TB = min(256, -(-B // 8) * 8)
    Bp = -(-B // TB) * TB
    n_blocks = Bp // TB

    # Fused wrapper prep: concat -> bf16 cast -> zero-pad rows and feature cols.
    x = jnp.concatenate([state, action], axis=1).astype(jnp.bfloat16)
    x = jnp.pad(x, ((0, Bp - B), (0, D_IN_PAD - d_in)))

    const = lambda shape: pl.BlockSpec(shape, lambda i: (0,) * len(shape))

    flops = 2 * Bp * (D_IN_PAD * H1_PAD + H1_PAD * H2_PAD + H2_PAD)
    bytes_accessed = int(
        x.size * 2                                       # bf16 input stream
        + (w1.size + w2.size + w3.size) * 2              # bf16 weights
        + (b1.size + b2.size + b3.size) * 4              # f32 biases
        + Bp * 4)                                        # f32 output

    q = pl.pallas_call(
        _critic_kernel,
        out_shape=jax.ShapeDtypeStruct((Bp, 1), jnp.float32),
        grid=(n_blocks,),
        in_specs=[
            pl.BlockSpec((TB, D_IN_PAD), lambda i: (i, 0)),      # streamed input
            const(w1.shape), const(b1.shape),                    # VMEM-resident
            const(w2.shape), const(b2.shape),
            const(w3.shape),
            pl.BlockSpec(memory_space=pltpu.MemorySpace.SMEM),   # scalar b3
        ],
        out_specs=pl.BlockSpec((TB, 1), lambda i: (i, 0)),
        compiler_params=pltpu.CompilerParams(
            dimension_semantics=("parallel",)),
        cost_estimate=pl.CostEstimate(
            flops=flops, transcendentals=0, bytes_accessed=bytes_accessed),
    )(x, w1, b1, w2, b2, w3, b3)
    return q[:B] if Bp != B else q


def init_critic_params(key, state_dim, action_dim):
    """PyTorch nn.Linear-style init U(-1/sqrt(fan_in), 1/sqrt(fan_in)) at the
    logical sizes, zero-padded to TPU-friendly shapes.  Weights are stored
    [in, out] (transposed vs. nn.Linear) in bf16; biases stay f32.  Zero pad
    columns + zero bias pads keep padded H1/H2 columns at exactly 0 through
    ReLU, so the logical result is unchanged."""
    def linear(key, fan_in, fan_out, pad_in, pad_out):
        kw, kb = jax.random.split(key)
        bound = 1.0 / (fan_in ** 0.5)
        w = jax.random.uniform(kw, (fan_in, fan_out), jnp.float32, -bound, bound)
        b = jax.random.uniform(kb, (1, fan_out), jnp.float32, -bound, bound)
        w = jnp.pad(w, ((0, pad_in - fan_in), (0, pad_out - fan_out)))
        b = jnp.pad(b, ((0, 0), (0, pad_out - fan_out)))
        return w, b

    k1, k2, k3 = jax.random.split(key, 3)
    d_in = state_dim + action_dim
    w1, b1 = linear(k1, d_in, H1_LOGICAL, D_IN_PAD, H1_PAD)
    w2, b2 = linear(k2, H1_LOGICAL, H2_LOGICAL, H1_PAD, H2_PAD)
    w3, b3 = linear(k3, H2_LOGICAL, 1, H2_PAD, 1)

    return (w1.astype(jnp.bfloat16), b1,
            w2.astype(jnp.bfloat16), b2,
            w3.T.astype(jnp.bfloat16),        # (1, H2_PAD) row for the VPU layer
            b3.reshape(1, 1))                 # scalar, lives in SMEM


if __name__ == "__main__":
    state_dim, action_dim, batch = 11, 3, 2

    key = jax.random.PRNGKey(0)
    kp, ks, ka = jax.random.split(key, 3)

    params = init_critic_params(kp, state_dim, action_dim)
    state = jax.random.normal(ks, (batch, state_dim), jnp.float32)
    action = jax.random.normal(ka, (batch, action_dim), jnp.float32)

    q = jax.block_until_ready(critic_forward(state, action, params))

    # Reference in plain JAX using the same (bf16, zero-padded) parameters and
    # the same cast points, so numerics match the kernel closely.
    w1, b1, w2, b2, w3, b3 = params
    x = jnp.concatenate([state, action], axis=1).astype(jnp.bfloat16)
    x = jnp.pad(x, ((0, 0), (0, D_IN_PAD - (state_dim + action_dim))))
    h1 = jnp.maximum(
        jnp.dot(x, w1, preferred_element_type=jnp.float32) + b1, 0.0)
    h2 = jnp.maximum(
        jnp.dot(h1.astype(jnp.bfloat16), w2,
                preferred_element_type=jnp.float32) + b2, 0.0)
    ref = jnp.sum(h2 * w3.astype(jnp.float32), axis=-1, keepdims=True) + b3[0, 0]

    assert q.shape == (batch, 1)
    assert jnp.allclose(q, ref, atol=1e-2, rtol=1e-2), (q, ref)

    print("KERNEL_OK")
</pallas_src>

<mosaic_0001>
module attributes {stable_mosaic.version = 11 : i64} {
  func.func @_critic_kernel(%arg0: i32, %arg1: memref<8x16xbf16, #tpu.memory_space<vmem>>, %arg2: memref<16x512xbf16, #tpu.memory_space<vmem>>, %arg3: memref<1x512xf32, #tpu.memory_space<vmem>>, %arg4: memref<512x384xbf16, #tpu.memory_space<vmem>>, %arg5: memref<1x384xf32, #tpu.memory_space<vmem>>, %arg6: memref<1x384xbf16, #tpu.memory_space<vmem>>, %arg7: memref<1x1xf32, #tpu.memory_space<smem>>, %arg8: memref<8x1xf32, #tpu.memory_space<vmem>>) attributes {dimension_semantics = [#tpu.dimension_semantics<parallel>], iteration_bounds = array<i64: 1>, scalar_prefetch = 0 : i64, scratch_operands = 0 : i64, tpu.core_type = #tpu.core_type<tc>, window_params = [{transform_indices = @transform_0, window_bounds = array<i64: 8, 16>}, {pipeline_mode = #tpu.pipeline_mode<synchronous>, transform_indices = @transform_1, window_bounds = array<i64: 16, 512>}, {pipeline_mode = #tpu.pipeline_mode<synchronous>, transform_indices = @transform_2, window_bounds = array<i64: 1, 512>}, {pipeline_mode = #tpu.pipeline_mode<synchronous>, transform_indices = @transform_3, window_bounds = array<i64: 512, 384>}, {pipeline_mode = #tpu.pipeline_mode<synchronous>, transform_indices = @transform_4, window_bounds = array<i64: 1, 384>}, {pipeline_mode = #tpu.pipeline_mode<synchronous>, transform_indices = @transform_5, window_bounds = array<i64: 1, 384>}, {transform_indices = @transform_6, window_bounds = array<i64: 1, 1>}, {transform_indices = @transform_7, window_bounds = array<i64: 8, 1>}]} {
    %c0 = arith.constant 0 : index
    %c0_0 = arith.constant 0 : index
    %0 = vector.load %arg1[%c0, %c0_0] : memref<8x16xbf16, #tpu.memory_space<vmem>>, vector<8x16xbf16>
    %c0_1 = arith.constant 0 : index
    %c0_2 = arith.constant 0 : index
    %1 = vector.load %arg2[%c0_1, %c0_2] : memref<16x512xbf16, #tpu.memory_space<vmem>>, vector<16x512xbf16>
    %cst = arith.constant dense<0.000000e+00> : vector<8x512xf32>
    %2 = tpu.matmul %0, %1, %cst {dimension_numbers = #tpu.dot_dimension_numbers<[1], [0], [0], [1], [0, 0, 1, 1], [], []>} : vector<8x16xbf16>, vector<16x512xbf16>, vector<8x512xf32> -> vector<8x512xf32>
    %c0_3 = arith.constant 0 : index
    %c0_4 = arith.constant 0 : index
    %3 = vector.load %arg3[%c0_3, %c0_4] : memref<1x512xf32, #tpu.memory_space<vmem>>, vector<1x512xf32>
    %4 = vector.broadcast %3 : vector<1x512xf32> to vector<8x512xf32>
    %5 = arith.addf %2, %4 : vector<8x512xf32>
    %cst_5 = arith.constant 0.000000e+00 : f32
    %6 = vector.broadcast %cst_5 : f32 to vector<8x512xf32>
    %7 = arith.maximumf %5, %6 : vector<8x512xf32>
    %8 = arith.truncf %7 : vector<8x512xf32> to vector<8x512xbf16>
    %c0_6 = arith.constant 0 : index
    %c0_7 = arith.constant 0 : index
    %9 = vector.load %arg4[%c0_6, %c0_7] : memref<512x384xbf16, #tpu.memory_space<vmem>>, vector<512x384xbf16>
    %cst_8 = arith.constant dense<0.000000e+00> : vector<8x384xf32>
    %10 = tpu.matmul %8, %9, %cst_8 {dimension_numbers = #tpu.dot_dimension_numbers<[1], [0], [0], [1], [0, 0, 1, 1], [], []>} : vector<8x512xbf16>, vector<512x384xbf16>, vector<8x384xf32> -> vector<8x384xf32>
    %c0_9 = arith.constant 0 : index
    %c0_10 = arith.constant 0 : index
    %11 = vector.load %arg5[%c0_9, %c0_10] : memref<1x384xf32, #tpu.memory_space<vmem>>, vector<1x384xf32>
    %12 = vector.broadcast %11 : vector<1x384xf32> to vector<8x384xf32>
    %13 = arith.addf %10, %12 : vector<8x384xf32>
    %cst_11 = arith.constant 0.000000e+00 : f32
    %14 = vector.broadcast %cst_11 : f32 to vector<8x384xf32>
    %15 = arith.maximumf %13, %14 : vector<8x384xf32>
    %c0_12 = arith.constant 0 : index
    %c0_13 = arith.constant 0 : index
    %16 = vector.load %arg6[%c0_12, %c0_13] : memref<1x384xbf16, #tpu.memory_space<vmem>>, vector<1x384xbf16>
    %17 = arith.extf %16 : vector<1x384xbf16> to vector<1x384xf32>
    %18 = vector.broadcast %17 : vector<1x384xf32> to vector<8x384xf32>
    %19 = arith.mulf %15, %18 : vector<8x384xf32>
    %cst_14 = arith.constant dense<0.000000e+00> : vector<8xf32>
    %20 = vector.multi_reduction <add>, %19, %cst_14 [1] : vector<8x384xf32> to vector<8xf32>
    %21 = vector.shape_cast %20 : vector<8xf32> to vector<8x1xf32>
    %c0_15 = arith.constant 0 : index
    %c0_16 = arith.constant 0 : index
    %22 = memref.load %arg7[%c0_15, %c0_16] : memref<1x1xf32, #tpu.memory_space<smem>>
    %23 = vector.broadcast %22 : f32 to vector<8x1xf32>
    %24 = arith.addf %21, %23 : vector<8x1xf32>
    %c0_17 = arith.constant 0 : index
    %c0_18 = arith.constant 0 : index
    %25 = vector.load %arg8[%c0_17, %c0_18] : memref<8x1xf32, #tpu.memory_space<vmem>>, vector<8x1xf32>
    tpu.vector_store %arg8[%c0_17, %c0_18], %24 {strides = array<i32>} : memref<8x1xf32, #tpu.memory_space<vmem>>, vector<8x1xf32>,
    return
  }
  func.func @transform_0(%arg0: i32) -> (i32, i32) {
    %c0_i32 = arith.constant 0 : i32
    %c0_i32_0 = arith.constant 0 : i32
    return %arg0, %c0_i32 : i32, i32
  }
  func.func @transform_1(%arg0: i32) -> (i32, i32) {
    %c0_i32 = arith.constant 0 : i32
    %c0_i32_0 = arith.constant 0 : i32
    %c0_i32_1 = arith.constant 0 : i32
    return %c0_i32, %c0_i32_0 : i32, i32
  }
  func.func @transform_2(%arg0: i32) -> (i32, i32) {
    %c0_i32 = arith.constant 0 : i32
    %c0_i32_0 = arith.constant 0 : i32
    %c0_i32_1 = arith.constant 0 : i32
    return %c0_i32, %c0_i32_0 : i32, i32
  }
  func.func @transform_3(%arg0: i32) -> (i32, i32) {
    %c0_i32 = arith.constant 0 : i32
    %c0_i32_0 = arith.constant 0 : i32
    %c0_i32_1 = arith.constant 0 : i32
    return %c0_i32, %c0_i32_0 : i32, i32
  }
  func.func @transform_4(%arg0: i32) -> (i32, i32) {
    %c0_i32 = arith.constant 0 : i32
    %c0_i32_0 = arith.constant 0 : i32
    %c0_i32_1 = arith.constant 0 : i32
    return %c0_i32, %c0_i32_0 : i32, i32
  }
  func.func @transform_5(%arg0: i32) -> (i32, i32) {
    %c0_i32 = arith.constant 0 : i32
    %c0_i32_0 = arith.constant 0 : i32
    %c0_i32_1 = arith.constant 0 : i32
    return %c0_i32, %c0_i32_0 : i32, i32
  }
  func.func @transform_6(%arg0: i32) -> (i32, i32) {
    %c0_i32 = arith.constant 0 : i32
    %c0_i32_0 = arith.constant 0 : i32
    %c0_i32_1 = arith.constant 0 : i32
    return %c0_i32, %c0_i32_0 : i32, i32
  }
  func.func @transform_7(%arg0: i32) -> (i32, i32) {
    %c0_i32 = arith.constant 0 : i32
    %c0_i32_0 = arith.constant 0 : i32
    return %arg0, %c0_i32 : i32, i32
  }
}

</mosaic_0001>

<llo_original>
// kernel: tpu_custom_call.1
$region0: #{tpu_custom_call.1}
  #allocation0 [shape = 'u32[]', space=smem, size = 0x4, offset = 0x4, fixed_abs, tag = 'smem constant byte address 0x4 - core index']
  #allocation1 [shape = 'u32[144,128]{1,0:T(1,128)}', space=vmem, size = 0x12000, scoped, tag = 'internal scratch']
  #allocation2 [shape = 'f32[1,1]{1,0:T(1,128)S(6)}', space=smem, size = 0x200, scoped, tag = 'scoped memory for tpu_custom_call.1']
  %s0 = inlined_call_operand.hbm [shape: bf16[8,16], index: 0, kind: input, shape index: {}]
  %s1 = inlined_call_operand.hbm [shape: bf16[16,512], index: 1, kind: input, shape index: {}]
  %s2 = inlined_call_operand.vmem [shape: f32[1,512], index: 2, kind: input, shape index: {}]
  %s3 = inlined_call_operand.hbm [shape: bf16[512,384], index: 3, kind: input, shape index: {}]
  %s4 = inlined_call_operand.vmem [shape: f32[1,384], index: 4, kind: input, shape index: {}]
  %s5 = inlined_call_operand.vmem [shape: bf16[1,384], index: 5, kind: input, shape index: {}]
  %s6 = inlined_call_operand.<no memory space> [shape: f32[1,1], index: 6, kind: input, shape index: {}]
  %s7 = inlined_call_operand.vmem [shape: f32[8,1], index: 7, kind: output, shape index: {}]
  %s8 = sld [smem:[#allocation0]]
  $region50: #{tpu_custom_call.1} parent=0
    _
  %s10 = ssub.s32 1, %s8
  %s11 = scalar_select 0, %s10, %s8
  %12 = sst [smem:[#allocation2]] %s6
  $region1: #{tpu_custom_call.1} parent=0
    #allocation3 [shape = 'u8[2048]{0}', space=vmem, size = 0x800, scoped, tag = 'input window, operand 0, single buffered']
    #allocation4 [shape = 's32[1]{0}', space=sflag, size = 0x4, scoped, tag = 'scoped memory for tpu_custom_call.1']
    #allocation5 [shape = 'u8[16384]{0}', space=vmem, size = 0x4000, scoped, tag = 'input window, operand 1, single buffered']
    #allocation6 [shape = 's32[1]{0}', space=sflag, size = 0x4, scoped, tag = 'scoped memory for tpu_custom_call.1']
    #allocation7 [shape = 'u8[393216]{0}', space=vmem, size = 0x60000, scoped, tag = 'input window, operand 3, single buffered']
    %13 = vsyncpa [#allocation4], 0
    %14 = vsyncpa [#allocation6], 0
    // Predicated region
    $region2: #{tpu_custom_call.1} parent=1 // pred_check
      _
    $region3: #{tpu_custom_call.1} parent=1 // pred_check_branch
      %16 = sbr.rel (0) target = $region5
    $region4: #{tpu_custom_call.1} parent=1 // pred_region
      %s18 = ssub.s32 64, 64
      %19 = vsyncadd [#allocation4], %s18
      %s21 = sshll.u32 [#allocation3], 4
      %s22 = int_to_ptr.vmem [resolvable:$true] %s21
      %24 = dma.hbm_to_vmem [thread:$0]  %s0, 64, %s22, [#allocation4]
    $region5: #{tpu_custom_call.1} parent=1 // pred_fallthru
      _
    // Predicated region
    $region6: #{tpu_custom_call.1} parent=1 // pred_check
      _
    $region7: #{tpu_custom_call.1} parent=1 // pred_check_branch
      %26 = sbr.rel (0) target = $region9
    $region8: #{tpu_custom_call.1} parent=1 // pred_region
      %s28 = ssub.s32 512, 512
      %29 = vsyncadd [#allocation6], %s28
      %s30 = sshll.u32 [#allocation5], 4
      %s31 = int_to_ptr.vmem [resolvable:$true] %s30
      %36 = dma.hbm_to_vmem [thread:$0]  %s1, 512, %s31, [#allocation6], 256, 256, 16
    $region9: #{tpu_custom_call.1} parent=1 // pred_fallthru
      _
    // Predicated region
    $region10: #{tpu_custom_call.1} parent=1 // pred_check
      _
    $region11: #{tpu_custom_call.1} parent=1 // pred_check_branch
      %38 = sbr.rel (0) target = $region13
    $region12: #{tpu_custom_call.1} parent=1 // pred_region
      _
    $region13: #{tpu_custom_call.1} parent=1 // pred_fallthru
      _
    // Predicated region
    $region14: #{tpu_custom_call.1} parent=1 // pred_check
      _
    $region15: #{tpu_custom_call.1} parent=1 // pred_check_branch
      %40 = sbr.rel (0) target = $region17
    $region16: #{tpu_custom_call.1} parent=1 // pred_region
      %s42 = ssub.s32 12288, 12288
      %43 = vsyncadd [#allocation6], %s42
      %s44 = sshll.u32 [#allocation7], 4
      %s45 = int_to_ptr.vmem [resolvable:$true] %s44
      %50 = dma.hbm_to_vmem [thread:$0]  %s3, 12288, %s45, [#allocation6], 192, 192, 12
    $region17: #{tpu_custom_call.1} parent=1 // pred_fallthru
      _
    // Predicated region
    $region18: #{tpu_custom_call.1} parent=1 // pred_check
      _
    $region19: #{tpu_custom_call.1} parent=1 // pred_check_branch
      %52 = sbr.rel (0) target = $region21
    $region20: #{tpu_custom_call.1} parent=1 // pred_region
      _
    $region21: #{tpu_custom_call.1} parent=1 // pred_fallthru
      _
    // Predicated region
    $region22: #{tpu_custom_call.1} parent=1 // pred_check
      _
    $region23: #{tpu_custom_call.1} parent=1 // pred_check_branch
      %54 = sbr.rel (0) target = $region25
    $region24: #{tpu_custom_call.1} parent=1 // pred_region
      _
    $region25: #{tpu_custom_call.1} parent=1 // pred_fallthru
      _
    // Predicated region
    $region26: #{tpu_custom_call.1} parent=1 // pred_check
      _
    $region27: #{tpu_custom_call.1} parent=1 // pred_check_branch
      %56 = sbr.rel (0) target = $region29
    $region28: #{tpu_custom_call.1} parent=1 // pred_region
      _
    $region29: #{tpu_custom_call.1} parent=1 // pred_fallthru
      _
    // Predicated region
    $region30: #{tpu_custom_call.1} parent=1 // pred_check
      _
    $region31: #{tpu_custom_call.1} parent=1 // pred_check_branch
      %58 = sbr.rel (0) target = $region33
    $region32: #{tpu_custom_call.1} parent=1 // pred_region
      %59 = dma.done [#allocation4], 64
    $region33: #{tpu_custom_call.1} parent=1 // pred_fallthru
      _
    // Predicated region
    $region34: #{tpu_custom_call.1} parent=1 // pred_check
      _
    $region35: #{tpu_custom_call.1} parent=1 // pred_check_branch
      %61 = sbr.rel (0) target = $region37
    $region36: #{tpu_custom_call.1} parent=1 // pred_region
      %62 = dma.done [#allocation6], 512
    $region37: #{tpu_custom_call.1} parent=1 // pred_fallthru
      _
    // Predicated region
    $region38: #{tpu_custom_call.1} parent=1 // pred_check
      _
    $region39: #{tpu_custom_call.1} parent=1 // pred_check_branch
      %64 = sbr.rel (0) target = $region41
    $region40: #{tpu_custom_call.1} parent=1 // pred_region
      %65 = dma.done [#allocation6], 12288
    $region41: #{tpu_custom_call.1} parent=1 // pred_fallthru
      _
    %v67 = vld [vmem:[#allocation3] sm:$0xf]
    %v68 = vld [vmem:[#allocation5] sm:$0xff]
    %v69 = vld [vmem:[#allocation5 + $0x8] sm:$0xff]
    %v70 = vld [vmem:[#allocation5 + $0x10] sm:$0xff]
    %v71 = vld [vmem:[#allocation5 + $0x18] sm:$0xff]
    %v72 = vld [vmem:[%s2] sm:$0xf]
    %v74 = vlaneseq
    %v75 = vshrl.u32 %v74, 7
    %v76 = vsub.s32 0, %v75
    %v77 = vrot.slane %v72, %v76
    %v78 = vlaneseq
    %v79 = vshrl.u32 %v78, 7
    %v80 = vsub.s32 1, %v79
    %v81 = vrot.slane %v72, %v80
    %v82 = vlaneseq
    %v83 = vshrl.u32 %v82, 7
    %v84 = vsub.s32 2, %v83
    %v85 = vrot.slane %v72, %v84
    %v86 = vlaneseq
    %v87 = vshrl.u32 %v86, 7
    %v88 = vsub.s32 3, %v87
    %v89 = vrot.slane %v72, %v88
    %v98 = vunpack.c.l.b16 %v68
    %v99 = vunpack.c.h.b16 %v68
    %v100 = vunpack.c.l.b16 %v69
    %v101 = vunpack.c.h.b16 %v69
    %v102 = vunpack.c.l.b16 %v70
    %v103 = vunpack.c.h.b16 %v70
    %v104 = vunpack.c.l.b16 %v71
    %v105 = vunpack.c.h.b16 %v71
    %v106 = vpack.c.b16 %v102, %v98
    %v107 = vpack.c.b16 %v103, %v99
    %v108 = vpack.c.b16 %v104, %v100
    %v109 = vpack.c.b16 %v105, %v101
    %vm114 = vcmask 130048
    %v116 = vsel %vm114, %v67, 0
    %118 = vmatprep.subr.bf16.mxu0 %v107
    %119 = vmatpush1.bf16.msra.mxu0 %v106
    %120 = vmatprep.subr.bf16.mxu0 0
    %121 = vmatpush1.bf16.msra.mxu0 0
    %122 = vmatprep.subr.bf16.mxu0 0
    %123 = vmatpush1.bf16.msra.mxu0 0
    %124 = vmatprep.subr.bf16.mxu0 0
    %125 = vmatpush1.bf16.msra.mxu0 0
    %126 = vmatprep.subr.bf16.mxu0 0
    %127 = vmatpush1.bf16.msra.mxu0 0
    %128 = vmatprep.subr.bf16.mxu0 0
    %129 = vmatpush1.bf16.msra.mxu0 0
    %130 = vmatprep.subr.bf16.mxu0 0
    %131 = vmatpush1.bf16.msra.mxu0 0
    %132 = vmatprep.subr.bf16.mxu0 0
    %133 = vmatpush1.bf16.msra.mxu0 0
    %134 = vmatprep.subr.bf16.mxu0 0
    %135 = vmatpush1.bf16.msra.mxu0 0
    %136 = vmatprep.subr.bf16.mxu0 0
    %137 = vmatpush1.bf16.msra.mxu0 0
    %138 = vmatprep.subr.bf16.mxu0 0
    %139 = vmatpush1.bf16.msra.mxu0 0
    %140 = vmatprep.subr.bf16.mxu0 0
    %141 = vmatpush1.bf16.msra.mxu0 0
    %142 = vmatprep.subr.bf16.mxu0 0
    %143 = vmatpush1.bf16.msra.mxu0 0
    %144 = vmatprep.subr.bf16.mxu0 0
    %145 = vmatpush1.bf16.msra.mxu0 0
    %146 = vmatprep.subr.bf16.mxu0 0
    %147 = vmatpush1.bf16.msra.mxu0 0
    %148 = vmatprep.subr.bf16.mxu0 0
    %149 = vmatpush1.bf16.msra.mxu0 0
    %150 = vmatprep.mubr.bf16.mxu0 0
    %151 = vmatmul.mubr.bf16.gmra.mrb[0].mxu0 %v116
    %v152 = vpop.f32.mrb[0].mxu0
    %v153 = vadd.f32 %v77, %v152
    %v154 = vpop.f32.mrb[0].mxu0
    %v155 = vadd.f32 %v81, %v154
    %v156 = vpop.f32.mrb[0].mxu0
    %v157 = vpop.f32.mrb[0].mxu0
    %158 = vdwg.mxu0
    %159 = vmatprep.subr.bf16.mxu0 %v109
    %160 = vmatpush1.bf16.msra.mxu0 %v108
    %161 = vmatprep.subr.bf16.mxu0 0
    %162 = vmatpush1.bf16.msra.mxu0 0
    %163 = vmatprep.subr.bf16.mxu0 0
    %164 = vmatpush1.bf16.msra.mxu0 0
    %165 = vmatprep.subr.bf16.mxu0 0
    %166 = vmatpush1.bf16.msra.mxu0 0
    %167 = vmatprep.subr.bf16.mxu0 0
    %168 = vmatpush1.bf16.msra.mxu0 0
    %169 = vmatprep.subr.bf16.mxu0 0
    %170 = vmatpush1.bf16.msra.mxu0 0
    %171 = vmatprep.subr.bf16.mxu0 0
    %172 = vmatpush1.bf16.msra.mxu0 0
    %173 = vmatprep.subr.bf16.mxu0 0
    %174 = vmatpush1.bf16.msra.mxu0 0
    %175 = vmatprep.subr.bf16.mxu0 0
    %176 = vmatpush1.bf16.msra.mxu0 0
    %177 = vmatprep.subr.bf16.mxu0 0
    %178 = vmatpush1.bf16.msra.mxu0 0
    %179 = vmatprep.subr.bf16.mxu0 0
    %180 = vmatpush1.bf16.msra.mxu0 0
    %181 = vmatprep.subr.bf16.mxu0 0
    %182 = vmatpush1.bf16.msra.mxu0 0
    %183 = vmatprep.subr.bf16.mxu0 0
    %184 = vmatpush1.bf16.msra.mxu0 0
    %185 = vmatprep.subr.bf16.mxu0 0
    %186 = vmatpush1.bf16.msra.mxu0 0
    %187 = vmatprep.subr.bf16.mxu0 0
    %188 = vmatpush1.bf16.msra.mxu0 0
    %189 = vmatprep.subr.bf16.mxu0 0
    %190 = vmatpush1.bf16.msra.mxu0 0
    %191 = vmatprep.mubr.bf16.mxu0 0
    %192 = vmatmul.mubr.bf16.gmra.mrb[0].mxu0 %v116
    %v193 = vpop.f32.mrb[0].mxu0
    %v194 = vadd.f32 %v85, %v193
    %v195 = vpop.f32.mrb[0].mxu0
    %v196 = vadd.f32 %v89, %v195
    %v197 = vpop.f32.mrb[0].mxu0
    %v198 = vpop.f32.mrb[0].mxu0
    %199 = vdwg.mxu0
    %v200 = vmax.f32 %v153, 0.0
    %v201 = vmax.f32 %v155, 0.0
    %v202 = vmax.f32 %v194, 0.0
    %v203 = vmax.f32 %v196, 0.0
    %v204 = vpack.c.bf16 %v200, %v200
    %v205 = vpack.c.bf16 %v201, %v201
    %v206 = vpack.c.bf16 %v202, %v202
    %v207 = vpack.c.bf16 %v203, %v203
    %v208 = vld [vmem:[#allocation7] sm:$0xff]
    %v209 = vld [vmem:[#allocation7 + $0x8] sm:$0xf]
    %v210 = vld [vmem:[#allocation7 + $0xc] sm:$0xff]
    %v211 = vld [vmem:[#allocation7 + $0x14] sm:$0xf]
    %v212 = vld [vmem:[#allocation7 + $0x18] sm:$0xff]
    %v213 = vld [vmem:[#allocation7 + $0x20] sm:$0xf]
    %v214 = vld [vmem:[#allocation7 + $0x24] sm:$0xff]
    %v215 = vld [vmem:[#allocation7 + $0x2c] sm:$0xf]
    %v216 = vld [vmem:[#allocation7 + $0x30] sm:$0xff]
    %v217 = vld [vmem:[#allocation7 + $0x38] sm:$0xf]
    %v218 = vld [vmem:[#allocation7 + $0x3c] sm:$0xff]
    %v219 = vld [vmem:[#allocation7 + $0x44] sm:$0xf]
    %v220 = vld [vmem:[#allocation7 + $0x48] sm:$0xff]
    %v221 = vld [vmem:[#allocation7 + $0x50] sm:$0xf]
    %v222 = vld [vmem:[#allocation7 + $0x54] sm:$0xff]
    %v223 = vld [vmem:[#allocation7 + $0x5c] sm:$0xf]
    %v224 = vld [vmem:[#allocation7 + $0x60] sm:$0xff]
    %v225 = vld [vmem:[#allocation7 + $0x68] sm:$0xf]
    %v226 = vld [vmem:[#allocation7 + $0x6c] sm:$0xff]
    %v227 = vld [vmem:[#allocation7 + $0x74] sm:$0xf]
    %v228 = vld [vmem:[#allocation7 + $0x78] sm:$0xff]
    %v229 = vld [vmem:[#allocation7 + $0x80] sm:$0xf]
    %v230 = vld [vmem:[#allocation7 + $0x84] sm:$0xff]
    %v231 = vld [vmem:[#allocation7 + $0x8c] sm:$0xf]
    %v232 = vld [vmem:[#allocation7 + $0x90] sm:$0xff]
    %v233 = vld [vmem:[#allocation7 + $0x98] sm:$0xf]
    %v234 = vld [vmem:[#allocation7 + $0x9c] sm:$0xff]
    %v235 = vld [vmem:[#allocation7 + $0xa4] sm:$0xf]
    %v236 = vld [vmem:[#allocation7 + $0xa8] sm:$0xff]
    %v237 = vld [vmem:[#allocation7 + $0xb0] sm:$0xf]
    %v238 = vld [vmem:[#allocation7 + $0xb4] sm:$0xff]
    %v239 = vld [vmem:[#allocation7 + $0xbc] sm:$0xf]
    %v240 = vld [vmem:[#allocation7 + $0xc0] sm:$0xff]
    %v241 = vld [vmem:[#allocation7 + $0xc8] sm:$0xf]
    %v242 = vld [vmem:[#allocation7 + $0xcc] sm:$0xff]
    %v243 = vld [vmem:[#allocation7 + $0xd4] sm:$0xf]
    %v244 = vld [vmem:[#allocation7 + $0xd8] sm:$0xff]
    %v245 = vld [vmem:[#allocation7 + $0xe0] sm:$0xf]
    %v246 = vld [vmem:[#allocation7 + $0xe4] sm:$0xff]
    %v247 = vld [vmem:[#allocation7 + $0xec] sm:$0xf]
    %v248 = vld [vmem:[#allocation7 + $0xf0] sm:$0xff]
    %v249 = vld [vmem:[#allocation7 + $0xf8] sm:$0xf]
    %v250 = vld [vmem:[#allocation7 + $0xfc] sm:$0xff]
    %v251 = vld [vmem:[#allocation7 + $0x104] sm:$0xf]
    %v252 = vld [vmem:[#allocation7 + $0x108] sm:$0xff]
    %v253 = vld [vmem:[#allocation7 + $0x110] sm:$0xf]
    %v254 = vld [vmem:[#allocation7 + $0x114] sm:$0xff]
    %v255 = vld [vmem:[#allocation7 + $0x11c] sm:$0xf]
    %v256 = vld [vmem:[#allocation7 + $0x120] sm:$0xff]
    %v257 = vld [vmem:[#allocation7 + $0x128] sm:$0xf]
    %v258 = vld [vmem:[#allocation7 + $0x12c] sm:$0xff]
    %v259 = vld [vmem:[#allocation7 + $0x134] sm:$0xf]
    %v260 = vld [vmem:[#allocation7 + $0x138] sm:$0xff]
    %v261 = vld [vmem:[#allocation7 + $0x140] sm:$0xf]
    %v262 = vld [vmem:[#allocation7 + $0x144] sm:$0xff]
    %v263 = vld [vmem:[#allocation7 + $0x14c] sm:$0xf]
    %v264 = vld [vmem:[#allocation7 + $0x150] sm:$0xff]
    %v265 = vld [vmem:[#allocation7 + $0x158] sm:$0xf]
    %v266 = vld [vmem:[#allocation7 + $0x15c] sm:$0xff]
    %v267 = vld [vmem:[#allocation7 + $0x164] sm:$0xf]
    %v268 = vld [vmem:[#allocation7 + $0x168] sm:$0xff]
    %v269 = vld [vmem:[#allocation7 + $0x170] sm:$0xf]
    %v270 = vld [vmem:[#allocation7 + $0x174] sm:$0xff]
    %v271 = vld [vmem:[#allocation7 + $0x17c] sm:$0xf]
    %v272 = vld [vmem:[#allocation7 + $0x180] sm:$0xff]
    %v273 = vld [vmem:[#allocation7 + $0x188] sm:$0xf]
    %v274 = vld [vmem:[#allocation7 + $0x18c] sm:$0xff]
    %v275 = vld [vmem:[#allocation7 + $0x194] sm:$0xf]
    %v276 = vld [vmem:[#allocation7 + $0x198] sm:$0xff]
    %v277 = vld [vmem:[#allocation7 + $0x1a0] sm:$0xf]
    %v278 = vld [vmem:[#allocation7 + $0x1a4] sm:$0xff]
    %v279 = vld [vmem:[#allocation7 + $0x1ac] sm:$0xf]
    %v280 = vld [vmem:[#allocation7 + $0x1b0] sm:$0xff]
    %v281 = vld [vmem:[#allocation7 + $0x1b8] sm:$0xf]
    %v282 = vld [vmem:[#allocation7 + $0x1bc] sm:$0xff]
    %v283 = vld [vmem:[#allocation7 + $0x1c4] sm:$0xf]
    %v284 = vld [vmem:[#allocation7 + $0x1c8] sm:$0xff]
    %v285 = vld [vmem:[#allocation7 + $0x1d0] sm:$0xf]
    %v286 = vld [vmem:[#allocation7 + $0x1d4] sm:$0xff]
    %v287 = vld [vmem:[#allocation7 + $0x1dc] sm:$0xf]
    %v288 = vld [vmem:[#allocation7 + $0x1e0] sm:$0xff]
    %v289 = vld [vmem:[#allocation7 + $0x1e8] sm:$0xf]
    %v290 = vld [vmem:[#allocation7 + $0x1ec] sm:$0xff]
    %v291 = vld [vmem:[#allocation7 + $0x1f4] sm:$0xf]
    %v292 = vld [vmem:[#allocation7 + $0x1f8] sm:$0xff]
    %v293 = vld [vmem:[#allocation7 + $0x200] sm:$0xf]
    %v294 = vld [vmem:[#allocation7 + $0x204] sm:$0xff]
    %v295 = vld [vmem:[#allocation7 + $0x20c] sm:$0xf]
    %v296 = vld [vmem:[#allocation7 + $0x210] sm:$0xff]
    %v297 = vld [vmem:[#allocation7 + $0x218] sm:$0xf]
    %v298 = vld [vmem:[#allocation7 + $0x21c] sm:$0xff]
    %v299 = vld [vmem:[#allocation7 + $0x224] sm:$0xf]
    %v300 = vld [vmem:[#allocation7 + $0x228] sm:$0xff]
    %v301 = vld [vmem:[#allocation7 + $0x230] sm:$0xf]
    %v302 = vld [vmem:[#allocation7 + $0x234] sm:$0xff]
    %v303 = vld [vmem:[#allocation7 + $0x23c] sm:$0xf]
    %v304 = vld [vmem:[#allocation7 + $0x240] sm:$0xff]
    %v305 = vld [vmem:[#allocation7 + $0x248] sm:$0xf]
    %v306 = vld [vmem:[#allocation7 + $0x24c] sm:$0xff]
    %v307 = vld [vmem:[#allocation7 + $0x254] sm:$0xf]
    %v308 = vld [vmem:[#allocation7 + $0x258] sm:$0xff]
    %v309 = vld [vmem:[#allocation7 + $0x260] sm:$0xf]
    %v310 = vld [vmem:[#allocation7 + $0x264] sm:$0xff]
    %v311 = vld [vmem:[#allocation7 + $0x26c] sm:$0xf]
    %v312 = vld [vmem:[#allocation7 + $0x270] sm:$0xff]
    %v313 = vld [vmem:[#allocation7 + $0x278] sm:$0xf]
    %v314 = vld [vmem:[#allocation7 + $0x27c] sm:$0xff]
    %v315 = vld [vmem:[#allocation7 + $0x284] sm:$0xf]
    %v316 = vld [vmem:[#allocation7 + $0x288] sm:$0xff]
    %v317 = vld [vmem:[#allocation7 + $0x290] sm:$0xf]
    %v318 = vld [vmem:[#allocation7 + $0x294] sm:$0xff]
    %v319 = vld [vmem:[#allocation7 + $0x29c] sm:$0xf]
    %v320 = vld [vmem:[#allocation7 + $0x2a0] sm:$0xff]
    %v321 = vld [vmem:[#allocation7 + $0x2a8] sm:$0xf]
    %v322 = vld [vmem:[#allocation7 + $0x2ac] sm:$0xff]
    %v323 = vld [vmem:[#allocation7 + $0x2b4] sm:$0xf]
    %v324 = vld [vmem:[#allocation7 + $0x2b8] sm:$0xff]
    %v325 = vld [vmem:[#allocation7 + $0x2c0] sm:$0xf]
    %v326 = vld [vmem:[#allocation7 + $0x2c4] sm:$0xff]
    %v327 = vld [vmem:[#allocation7 + $0x2cc] sm:$0xf]
    %v328 = vld [vmem:[#allocation7 + $0x2d0] sm:$0xff]
    %v329 = vld [vmem:[#allocation7 + $0x2d8] sm:$0xf]
    %v330 = vld [vmem:[#allocation7 + $0x2dc] sm:$0xff]
    %v331 = vld [vmem:[#allocation7 + $0x2e4] sm:$0xf]
    %v332 = vld [vmem:[#allocation7 + $0x2e8] sm:$0xff]
    %v333 = vld [vmem:[#allocation7 + $0x2f0] sm:$0xf]
    %v334 = vld [vmem:[#allocation7 + $0x2f4] sm:$0xff]
    %v335 = vld [vmem:[#allocation7 + $0x2fc] sm:$0xf]
    %v336 = vld [vmem:[%s4] sm:$0x7]
    %v338 = vlaneseq
    %v339 = vshrl.u32 %v338, 7
    %v340 = vsub.s32 0, %v339
    %v341 = vrot.slane %v336, %v340
    %v342 = vlaneseq
    %v343 = vshrl.u32 %v342, 7
    %v344 = vsub.s32 1, %v343
    %v345 = vrot.slane %v336, %v344
    %v346 = vlaneseq
    %v347 = vshrl.u32 %v346, 7
    %v348 = vsub.s32 2, %v347
    %v349 = vrot.slane %v336, %v348
    %v481 = vunpack.c.l.b16 %v208
    %v482 = vunpack.c.h.b16 %v208
    %v483 = vunpack.c.l.b16 %v209
    %v484 = vunpack.c.l.b16 %v210
    %v485 = vunpack.c.h.b16 %v210
    %v486 = vunpack.c.l.b16 %v211
    %v487 = vunpack.c.l.b16 %v212
    %v488 = vunpack.c.h.b16 %v212
    %v489 = vunpack.c.l.b16 %v213
    %v490 = vunpack.c.l.b16 %v214
    %v491 = vunpack.c.h.b16 %v214
    %v492 = vunpack.c.l.b16 %v215
    %v493 = vunpack.c.l.b16 %v216
    %v494 = vunpack.c.h.b16 %v216
    %v495 = vunpack.c.l.b16 %v217
    %v496 = vunpack.c.l.b16 %v218
    %v497 = vunpack.c.h.b16 %v218
    %v498 = vunpack.c.l.b16 %v219
    %v499 = vunpack.c.l.b16 %v220
    %v500 = vunpack.c.h.b16 %v220
    %v501 = vunpack.c.l.b16 %v221
    %v502 = vunpack.c.l.b16 %v222
    %v503 = vunpack.c.h.b16 %v222
    %v504 = vunpack.c.l.b16 %v223
    %v505 = vunpack.c.l.b16 %v224
    %v506 = vunpack.c.h.b16 %v224
    %v507 = vunpack.c.l.b16 %v225
    %v508 = vunpack.c.l.b16 %v226
    %v509 = vunpack.c.h.b16 %v226
    %v510 = vunpack.c.l.b16 %v227
    %v511 = vunpack.c.l.b16 %v228
    %v512 = vunpack.c.h.b16 %v228
    %v513 = vunpack.c.l.b16 %v229
    %v514 = vunpack.c.l.b16 %v230
    %v515 = vunpack.c.h.b16 %v230
    %v516 = vunpack.c.l.b16 %v231
    %v517 = vunpack.c.l.b16 %v232
    %v518 = vunpack.c.h.b16 %v232
    %v519 = vunpack.c.l.b16 %v233
    %v520 = vunpack.c.l.b16 %v234
    %v521 = vunpack.c.h.b16 %v234
    %v522 = vunpack.c.l.b16 %v235
    %v523 = vunpack.c.l.b16 %v236
    %v524 = vunpack.c.h.b16 %v236
    %v525 = vunpack.c.l.b16 %v237
    %v526 = vunpack.c.l.b16 %v238
    %v527 = vunpack.c.h.b16 %v238
    %v528 = vunpack.c.l.b16 %v239
    %v529 = vunpack.c.l.b16 %v240
    %v530 = vunpack.c.h.b16 %v240
    %v531 = vunpack.c.l.b16 %v241
    %v532 = vunpack.c.l.b16 %v242
    %v533 = vunpack.c.h.b16 %v242
    %v534 = vunpack.c.l.b16 %v243
    %v535 = vunpack.c.l.b16 %v244
    %v536 = vunpack.c.h.b16 %v244
    %v537 = vunpack.c.l.b16 %v245
    %v538 = vunpack.c.l.b16 %v246
    %v539 = vunpack.c.h.b16 %v246
    %v540 = vunpack.c.l.b16 %v247
    %v541 = vunpack.c.l.b16 %v248
    %v542 = vunpack.c.h.b16 %v248
    %v543 = vunpack.c.l.b16 %v249
    %v544 = vunpack.c.l.b16 %v250
    %v545 = vunpack.c.h.b16 %v250
    %v546 = vunpack.c.l.b16 %v251
    %v547 = vunpack.c.l.b16 %v252
    %v548 = vunpack.c.h.b16 %v252
    %v549 = vunpack.c.l.b16 %v253
    %v550 = vunpack.c.l.b16 %v254
    %v551 = vunpack.c.h.b16 %v254
    %v552 = vunpack.c.l.b16 %v255
    %v553 = vunpack.c.l.b16 %v256
    %v554 = vunpack.c.h.b16 %v256
    %v555 = vunpack.c.l.b16 %v257
    %v556 = vunpack.c.l.b16 %v258
    %v557 = vunpack.c.h.b16 %v258
    %v558 = vunpack.c.l.b16 %v259
    %v559 = vunpack.c.l.b16 %v260
    %v560 = vunpack.c.h.b16 %v260
    %v561 = vunpack.c.l.b16 %v261
    %v562 = vunpack.c.l.b16 %v262
    %v563 = vunpack.c.h.b16 %v262
    %v564 = vunpack.c.l.b16 %v263
    %v565 = vunpack.c.l.b16 %v264
    %v566 = vunpack.c.h.b16 %v264
    %v567 = vunpack.c.l.b16 %v265
    %v568 = vunpack.c.l.b16 %v266
    %v569 = vunpack.c.h.b16 %v266
    %v570 = vunpack.c.l.b16 %v267
    %v571 = vunpack.c.l.b16 %v268
    %v572 = vunpack.c.h.b16 %v268
    %v573 = vunpack.c.l.b16 %v269
    %v574 = vunpack.c.l.b16 %v270
    %v575 = vunpack.c.h.b16 %v270
    %v576 = vunpack.c.l.b16 %v271
    %v577 = vunpack.c.l.b16 %v272
    %v578 = vunpack.c.h.b16 %v272
    %v579 = vunpack.c.l.b16 %v273
    %v580 = vunpack.c.l.b16 %v274
    %v581 = vunpack.c.h.b16 %v274
    %v582 = vunpack.c.l.b16 %v275
    %v583 = vunpack.c.l.b16 %v276
    %v584 = vunpack.c.h.b16 %v276
    %v585 = vunpack.c.l.b16 %v277
    %v586 = vunpack.c.l.b16 %v278
    %v587 = vunpack.c.h.b16 %v278
    %v588 = vunpack.c.l.b16 %v279
    %v589 = vunpack.c.l.b16 %v280
    %v590 = vunpack.c.h.b16 %v280
    %v591 = vunpack.c.l.b16 %v281
    %v592 = vunpack.c.l.b16 %v282
    %v593 = vunpack.c.h.b16 %v282
    %v594 = vunpack.c.l.b16 %v283
    %v595 = vunpack.c.l.b16 %v284
    %v596 = vunpack.c.h.b16 %v284
    %v597 = vunpack.c.l.b16 %v285
    %v598 = vunpack.c.l.b16 %v286
    %v599 = vunpack.c.h.b16 %v286
    %v600 = vunpack.c.l.b16 %v287
    %v601 = vunpack.c.l.b16 %v288
    %v602 = vunpack.c.h.b16 %v288
    %v603 = vunpack.c.l.b16 %v289
    %v604 = vunpack.c.l.b16 %v290
    %v605 = vunpack.c.h.b16 %v290
    %v606 = vunpack.c.l.b16 %v291
    %v607 = vunpack.c.l.b16 %v292
    %v608 = vunpack.c.h.b16 %v292
    %v609 = vunpack.c.l.b16 %v293
    %v610 = vunpack.c.l.b16 %v294
    %v611 = vunpack.c.h.b16 %v294
    %v612 = vunpack.c.l.b16 %v295
    %v613 = vunpack.c.l.b16 %v296
    %v614 = vunpack.c.h.b16 %v296
    %v615 = vunpack.c.l.b16 %v297
    %v616 = vunpack.c.l.b16 %v298
    %v617 = vunpack.c.h.b16 %v298
    %v618 = vunpack.c.l.b16 %v299
    %v619 = vunpack.c.l.b16 %v300
    %v620 = vunpack.c.h.b16 %v300
    %v621 = vunpack.c.l.b16 %v301
    %v622 = vunpack.c.l.b16 %v302
    %v623 = vunpack.c.h.b16 %v302
    %v624 = vunpack.c.l.b16 %v303
    %v625 = vunpack.c.l.b16 %v304
    %v626 = vunpack.c.h.b16 %v304
    %v627 = vunpack.c.l.b16 %v305
    %v628 = vunpack.c.l.b16 %v306
    %v629 = vunpack.c.h.b16 %v306
    %v630 = vunpack.c.l.b16 %v307
    %v631 = vunpack.c.l.b16 %v308
    %v632 = vunpack.c.h.b16 %v308
    %v633 = vunpack.c.l.b16 %v309
    %v634 = vunpack.c.l.b16 %v310
    %v635 = vunpack.c.h.b16 %v310
    %v636 = vunpack.c.l.b16 %v311
    %v637 = vunpack.c.l.b16 %v312
    %v638 = vunpack.c.h.b16 %v312
    %v639 = vunpack.c.l.b16 %v313
    %v640 = vunpack.c.l.b16 %v314
    %v641 = vunpack.c.h.b16 %v314
    %v642 = vunpack.c.l.b16 %v315
    %v643 = vunpack.c.l.b16 %v316
    %v644 = vunpack.c.h.b16 %v316
    %v645 = vunpack.c.l.b16 %v317
    %v646 = vunpack.c.l.b16 %v318
    %v647 = vunpack.c.h.b16 %v318
    %v648 = vunpack.c.l.b16 %v319
    %v649 = vunpack.c.l.b16 %v320
    %v650 = vunpack.c.h.b16 %v320
    %v651 = vunpack.c.l.b16 %v321
    %v652 = vunpack.c.l.b16 %v322
    %v653 = vunpack.c.h.b16 %v322
    %v654 = vunpack.c.l.b16 %v323
    %v655 = vunpack.c.l.b16 %v324
    %v656 = vunpack.c.h.b16 %v324
    %v657 = vunpack.c.l.b16 %v325
    %v658 = vunpack.c.l.b16 %v326
    %v659 = vunpack.c.h.b16 %v326
    %v660 = vunpack.c.l.b16 %v327
    %v661 = vunpack.c.l.b16 %v328
    %v662 = vunpack.c.h.b16 %v328
    %v663 = vunpack.c.l.b16 %v329
    %v664 = vunpack.c.l.b16 %v330
    %v665 = vunpack.c.h.b16 %v330
    %v666 = vunpack.c.l.b16 %v331
    %v667 = vunpack.c.l.b16 %v332
    %v668 = vunpack.c.h.b16 %v332
    %v669 = vunpack.c.l.b16 %v333
    %v670 = vunpack.c.l.b16 %v334
    %v671 = vunpack.c.h.b16 %v334
    %v672 = vunpack.c.l.b16 %v335
    %v673 = vpack.c.b16 %v484, %v481
    %v674 = vpack.c.b16 %v485, %v482
    %v675 = vpack.c.b16 %v486, %v483
    %v676 = vpack.c.b16 %v490, %v487
    %v677 = vpack.c.b16 %v491, %v488
    %v678 = vpack.c.b16 %v492, %v489
    %v679 = vpack.c.b16 %v496, %v493
    %v680 = vpack.c.b16 %v497, %v494
    %v681 = vpack.c.b16 %v498, %v495
    %v682 = vpack.c.b16 %v502, %v499
    %v683 = vpack.c.b16 %v503, %v500
    %v684 = vpack.c.b16 %v504, %v501
    %v685 = vpack.c.b16 %v508, %v505
    %v686 = vpack.c.b16 %v509, %v506
    %v687 = vpack.c.b16 %v510, %v507
    %v688 = vpack.c.b16 %v514, %v511
    %v689 = vpack.c.b16 %v515, %v512
    %v690 = vpack.c.b16 %v516, %v513
    %v691 = vpack.c.b16 %v520, %v517
    %v692 = vpack.c.b16 %v521, %v518
    %v693 = vpack.c.b16 %v522, %v519
    %v694 = vpack.c.b16 %v526, %v523
    %v695 = vpack.c.b16 %v527, %v524
    %v696 = vpack.c.b16 %v528, %v525
    %v697 = vpack.c.b16 %v532, %v529
    %v698 = vpack.c.b16 %v533, %v530
    %v699 = vpack.c.b16 %v534, %v531
    %v700 = vpack.c.b16 %v538, %v535
    %v701 = vpack.c.b16 %v539, %v536
    %v702 = vpack.c.b16 %v540, %v537
    %v703 = vpack.c.b16 %v544, %v541
    %v704 = vpack.c.b16 %v545, %v542
    %v705 = vpack.c.b16 %v546, %v543
    %v706 = vpack.c.b16 %v550, %v547
    %v707 = vpack.c.b16 %v551, %v548
    %v708 = vpack.c.b16 %v552, %v549
    %v709 = vpack.c.b16 %v556, %v553
    %v710 = vpack.c.b16 %v557, %v554
    %v711 = vpack.c.b16 %v558, %v555
    %v712 = vpack.c.b16 %v562, %v559
    %v713 = vpack.c.b16 %v563, %v560
    %v714 = vpack.c.b16 %v564, %v561
    %v715 = vpack.c.b16 %v568, %v565
    %v716 = vpack.c.b16 %v569, %v566
    %v717 = vpack.c.b16 %v570, %v567
    %v718 = vpack.c.b16 %v574, %v571
    %v719 = vpack.c.b16 %v575, %v572
    %v720 = vpack.c.b16 %v576, %v573
    %v721 = vpack.c.b16 %v580, %v577
    %v722 = vpack.c.b16 %v581, %v578
    %v723 = vpack.c.b16 %v582, %v579
    %v724 = vpack.c.b16 %v586, %v583
    %v725 = vpack.c.b16 %v587, %v584
    %v726 = vpack.c.b16 %v588, %v585
    %v727 = vpack.c.b16 %v592, %v589
    %v728 = vpack.c.b16 %v593, %v590
    %v729 = vpack.c.b16 %v594, %v591
    %v730 = vpack.c.b16 %v598, %v595
    %v731 = vpack.c.b16 %v599, %v596
    %v732 = vpack.c.b16 %v600, %v597
    %v733 = vpack.c.b16 %v604, %v601
    %v734 = vpack.c.b16 %v605, %v602
    %v735 = vpack.c.b16 %v606, %v603
    %v736 = vpack.c.b16 %v610, %v607
    %v737 = vpack.c.b16 %v611, %v608
    %v738 = vpack.c.b16 %v612, %v609
    %v739 = vpack.c.b16 %v616, %v613
    %v740 = vpack.c.b16 %v617, %v614
    %v741 = vpack.c.b16 %v618, %v615
    %v742 = vpack.c.b16 %v622, %v619
    %v743 = vpack.c.b16 %v623, %v620
    %v744 = vpack.c.b16 %v624, %v621
    %v745 = vpack.c.b16 %v628, %v625
    %v746 = vpack.c.b16 %v629, %v626
    %v747 = vpack.c.b16 %v630, %v627
    %v748 = vpack.c.b16 %v634, %v631
    %v749 = vpack.c.b16 %v635, %v632
    %v750 = vpack.c.b16 %v636, %v633
    %v751 = vpack.c.b16 %v640, %v637
    %v752 = vpack.c.b16 %v641, %v638
    %v753 = vpack.c.b16 %v642, %v639
    %v754 = vpack.c.b16 %v646, %v643
    %v755 = vpack.c.b16 %v647, %v644
    %v756 = vpack.c.b16 %v648, %v645
    %v757 = vpack.c.b16 %v652, %v649
    %v758 = vpack.c.b16 %v653, %v650
    %v759 = vpack.c.b16 %v654, %v651
    %v760 = vpack.c.b16 %v658, %v655
    %v761 = vpack.c.b16 %v659, %v656
    %v762 = vpack.c.b16 %v660, %v657
    %v763 = vpack.c.b16 %v664, %v661
    %v764 = vpack.c.b16 %v665, %v662
    %v765 = vpack.c.b16 %v666, %v663
    %v766 = vpack.c.b16 %v670, %v667
    %v767 = vpack.c.b16 %v671, %v668
    %v768 = vpack.c.b16 %v672, %v669
    %865 = vmatprep.subr.bf16.mxu0 %v674
    %866 = vmatpush1.bf16.msra.mxu0 %v673
    %867 = vmatprep.subr.bf16.mxu0 %v677
    %868 = vmatpush1.bf16.msra.mxu0 %v676
    %869 = vmatprep.subr.bf16.mxu0 %v680
    %870 = vmatpush1.bf16.msra.mxu0 %v679
    %871 = vmatprep.subr.bf16.mxu0 %v683
    %872 = vmatpush1.bf16.msra.mxu0 %v682
    %873 = vmatprep.subr.bf16.mxu0 %v686
    %874 = vmatpush1.bf16.msra.mxu0 %v685
    %875 = vmatprep.subr.bf16.mxu0 %v689
    %876 = vmatpush1.bf16.msra.mxu0 %v688
    %877 = vmatprep.subr.bf16.mxu0 %v692
    %878 = vmatpush1.bf16.msra.mxu0 %v691
    %879 = vmatprep.subr.bf16.mxu0 %v695
    %880 = vmatpush1.bf16.msra.mxu0 %v694
    %881 = vmatprep.subr.bf16.mxu0 %v698
    %882 = vmatpush1.bf16.msra.mxu0 %v697
    %883 = vmatprep.subr.bf16.mxu0 %v701
    %884 = vmatpush1.bf16.msra.mxu0 %v700
    %885 = vmatprep.subr.bf16.mxu0 %v704
    %886 = vmatpush1.bf16.msra.mxu0 %v703
    %887 = vmatprep.subr.bf16.mxu0 %v707
    %888 = vmatpush1.bf16.msra.mxu0 %v706
    %889 = vmatprep.subr.bf16.mxu0 %v710
    %890 = vmatpush1.bf16.msra.mxu0 %v709
    %891 = vmatprep.subr.bf16.mxu0 %v713
    %892 = vmatpush1.bf16.msra.mxu0 %v712
    %893 = vmatprep.subr.bf16.mxu0 %v716
    %894 = vmatpush1.bf16.msra.mxu0 %v715
    %895 = vmatprep.subr.bf16.mxu0 %v719
    %896 = vmatpush1.bf16.msra.mxu0 %v718
    %897 = vmatprep.mubr.bf16.mxu0 %v205
    %898 = vmatmul.mubr.bf16.gmra.mrb[0].mxu0 %v204
    %v899 = vpop.f32.mrb[0].mxu0
    %v900 = vadd.f32 %v341, %v899
    %v901 = vpop.f32.mrb[0].mxu0
    %v902 = vadd.f32 %v345, %v901
    %v903 = vpop.f32.mrb[0].mxu0
    %v904 = vpop.f32.mrb[0].mxu0
    %905 = vdwg.mxu0
    %906 = vmatprep.subr.bf16.mxu0 %v722
    %907 = vmatpush1.bf16.msra.mxu0 %v721
    %908 = vmatprep.subr.bf16.mxu0 %v725
    %909 = vmatpush1.bf16.msra.mxu0 %v724
    %910 = vmatprep.subr.bf16.mxu0 %v728
    %911 = vmatpush1.bf16.msra.mxu0 %v727
    %912 = vmatprep.subr.bf16.mxu0 %v731
    %913 = vmatpush1.bf16.msra.mxu0 %v730
    %914 = vmatprep.subr.bf16.mxu0 %v734
    %915 = vmatpush1.bf16.msra.mxu0 %v733
    %916 = vmatprep.subr.bf16.mxu0 %v737
    %917 = vmatpush1.bf16.msra.mxu0 %v736
    %918 = vmatprep.subr.bf16.mxu0 %v740
    %919 = vmatpush1.bf16.msra.mxu0 %v739
    %920 = vmatprep.subr.bf16.mxu0 %v743
    %921 = vmatpush1.bf16.msra.mxu0 %v742
    %922 = vmatprep.subr.bf16.mxu0 %v746
    %923 = vmatpush1.bf16.msra.mxu0 %v745
    %924 = vmatprep.subr.bf16.mxu0 %v749
    %925 = vmatpush1.bf16.msra.mxu0 %v748
    %926 = vmatprep.subr.bf16.mxu0 %v752
    %927 = vmatpush1.bf16.msra.mxu0 %v751
    %928 = vmatprep.subr.bf16.mxu0 %v755
    %929 = vmatpush1.bf16.msra.mxu0 %v754
    %930 = vmatprep.subr.bf16.mxu0 %v758
    %931 = vmatpush1.bf16.msra.mxu0 %v757
    %932 = vmatprep.subr.bf16.mxu0 %v761
    %933 = vmatpush1.bf16.msra.mxu0 %v760
    %934 = vmatprep.subr.bf16.mxu0 %v764
    %935 = vmatpush1.bf16.msra.mxu0 %v763
    %936 = vmatprep.subr.bf16.mxu0 %v767
    %937 = vmatpush1.bf16.msra.mxu0 %v766
    %938 = vmatprep.mubr.bf16.mxu0 %v207
    %939 = vmatmul.mubr.bf16.gmra.mrb[0].mxu0 %v206
    %v940 = vpop.f32.mrb[0].mxu0
    %v941 = vadd.f32 %v900, %v940
    %v942 = vpop.f32.mrb[0].mxu0
    %v943 = vadd.f32 %v902, %v942
    %v944 = vpop.f32.mrb[0].mxu0
    %v945 = vpop.f32.mrb[0].mxu0
    %946 = vdwg.mxu0
    %947 = vmatprep.subr.bf16.mxu0 0
    %948 = vmatpush1.bf16.msra.mxu0 %v675
    %949 = vmatprep.subr.bf16.mxu0 0
    %950 = vmatpush1.bf16.msra.mxu0 %v678
    %951 = vmatprep.subr.bf16.mxu0 0
    %952 = vmatpush1.bf16.msra.mxu0 %v681
    %953 = vmatprep.subr.bf16.mxu0 0
    %954 = vmatpush1.bf16.msra.mxu0 %v684
    %955 = vmatprep.subr.bf16.mxu0 0
    %956 = vmatpush1.bf16.msra.mxu0 %v687
    %957 = vmatprep.subr.bf16.mxu0 0
    %958 = vmatpush1.bf16.msra.mxu0 %v690
    %959 = vmatprep.subr.bf16.mxu0 0
    %960 = vmatpush1.bf16.msra.mxu0 %v693
    %961 = vmatprep.subr.bf16.mxu0 0
    %962 = vmatpush1.bf16.msra.mxu0 %v696
    %963 = vmatprep.subr.bf16.mxu0 0
    %964 = vmatpush1.bf16.msra.mxu0 %v699
    %965 = vmatprep.subr.bf16.mxu0 0
    %966 = vmatpush1.bf16.msra.mxu0 %v702
    %967 = vmatprep.subr.bf16.mxu0 0
    %968 = vmatpush1.bf16.msra.mxu0 %v705
    %969 = vmatprep.subr.bf16.mxu0 0
    %970 = vmatpush1.bf16.msra.mxu0 %v708
    %971 = vmatprep.subr.bf16.mxu0 0
    %972 = vmatpush1.bf16.msra.mxu0 %v711
    %973 = vmatprep.subr.bf16.mxu0 0
    %974 = vmatpush1.bf16.msra.mxu0 %v714
    %975 = vmatprep.subr.bf16.mxu0 0
    %976 = vmatpush1.bf16.msra.mxu0 %v717
    %977 = vmatprep.subr.bf16.mxu0 0
    %978 = vmatpush1.bf16.msra.mxu0 %v720
    %979 = vmatprep.mubr.bf16.mxu0 %v205
    %980 = vmatmul.mubr.bf16.gmra.mrb[0].mxu0 %v204
    %v981 = vpop.f32.mrb[0].mxu0
    %v982 = vadd.f32 %v349, %v981
    %v983 = vpop.f32.mrb[0].mxu0
    %v984 = vpop.f32.mrb[0].mxu0
    %v985 = vpop.f32.mrb[0].mxu0
    %986 = vdwg.mxu0
    %987 = vmatprep.subr.bf16.mxu0 0
    %988 = vmatpush1.bf16.msra.mxu0 %v723
    %989 = vmatprep.subr.bf16.mxu0 0
    %990 = vmatpush1.bf16.msra.mxu0 %v726
    %991 = vmatprep.subr.bf16.mxu0 0
    %992 = vmatpush1.bf16.msra.mxu0 %v729
    %993 = vmatprep.subr.bf16.mxu0 0
    %994 = vmatpush1.bf16.msra.mxu0 %v732
    %995 = vmatprep.subr.bf16.mxu0 0
    %996 = vmatpush1.bf16.msra.mxu0 %v735
    %997 = vmatprep.subr.bf16.mxu0 0
    %998 = vmatpush1.bf16.msra.mxu0 %v738
    %999 = vmatprep.subr.bf16.mxu0 0
    %1000 = vmatpush1.bf16.msra.mxu0 %v741
    %1001 = vmatprep.subr.bf16.mxu0 0
    %1002 = vmatpush1.bf16.msra.mxu0 %v744
    %1003 = vmatprep.subr.bf16.mxu0 0
    %1004 = vmatpush1.bf16.msra.mxu0 %v747
    %1005 = vmatprep.subr.bf16.mxu0 0
    %1006 = vmatpush1.bf16.msra.mxu0 %v750
    %1007 = vmatprep.subr.bf16.mxu0 0
    %1008 = vmatpush1.bf16.msra.mxu0 %v753
    %1009 = vmatprep.subr.bf16.mxu0 0
    %1010 = vmatpush1.bf16.msra.mxu0 %v756
    %1011 = vmatprep.subr.bf16.mxu0 0
    %1012 = vmatpush1.bf16.msra.mxu0 %v759
    %1013 = vmatprep.subr.bf16.mxu0 0
    %1014 = vmatpush1.bf16.msra.mxu0 %v762
    %1015 = vmatprep.subr.bf16.mxu0 0
    %1016 = vmatpush1.bf16.msra.mxu0 %v765
    %1017 = vmatprep.subr.bf16.mxu0 0
    %1018 = vmatpush1.bf16.msra.mxu0 %v768
    %1019 = vmatprep.mubr.bf16.mxu0 %v207
    %1020 = vmatmul.mubr.bf16.gmra.mrb[0].mxu0 %v206
    %v1021 = vpop.f32.mrb[0].mxu0
    %v1022 = vadd.f32 %v982, %v1021
    %v1023 = vpop.f32.mrb[0].mxu0
    %v1024 = vpop.f32.mrb[0].mxu0
    %v1025 = vpop.f32.mrb[0].mxu0
    %1026 = vdwg.mxu0
    %v1027 = vmax.f32 %v941, 0.0
    %v1028 = vmax.f32 %v943, 0.0
    %v1029 = vmax.f32 %v1022, 0.0
    %v1030 = vld [vmem:[%s5] sm:$0x7]
    %v1031 = vunpack.c.l.bf16 %v1030
    %v1033 = vlaneseq
    %v1034 = vshrl.u32 %v1033, 7
    %v1035 = vsub.s32 0, %v1034
    %v1036 = vrot.slane %v1031, %v1035
    %v1037 = vlaneseq
    %v1038 = vshrl.u32 %v1037, 7
    %v1039 = vsub.s32 2, %v1038
    %v1040 = vrot.slane %v1031, %v1039
    %v1041 = vlaneseq
    %v1042 = vshrl.u32 %v1041, 7
    %v1043 = vsub.s32 4, %v1042
    %v1044 = vrot.slane %v1031, %v1043
    %v1048 = vlaneseq
    %v1049 = vshrl.u32 %v1048, 7
    %v1050 = vsub.s32 0, %v1049
    %v1051 = vrot.slane %v1036, %v1050
    %v1052 = vlaneseq
    %v1053 = vshrl.u32 %v1052, 7
    %v1054 = vsub.s32 0, %v1053
    %v1055 = vrot.slane %v1040, %v1054
    %v1056 = vlaneseq
    %v1057 = vshrl.u32 %v1056, 7
    %v1058 = vsub.s32 0, %v1057
    %v1059 = vrot.slane %v1044, %v1058
    %v1060 = vmul.f32 %v1027, %v1051
    %v1061 = vmul.f32 %v1028, %v1055
    %v1062 = vmul.f32 %v1029, %v1059
    %v1063 = vadd.f32 %v1060, %v1061
    %v1064 = vadd.f32 %v1063, %v1062
    %1065 = vadd.xlane.f32.xlu0 %v1064
    %v1066 = vpop.xlane.xlu0 %1065
    %s1067 = sld [smem:[#allocation2]]
    %v1068 = vstv %s1067
    %v1069 = vadd.f32 %v1066, %v1068
    %vm1070 = vcmask 7168
    %1071 = vst.msk [vmem:[%s7] sm:$0xff] %vm1070, %v1069
    // Predicated region
    $region42: #{tpu_custom_call.1} parent=1 // pred_check
      _
    $region43: #{tpu_custom_call.1} parent=1 // pred_check_branch
      %1073 = sbr.rel (0) target = $region45
    $region44: #{tpu_custom_call.1} parent=1 // pred_region
      _
    $region45: #{tpu_custom_call.1} parent=1 // pred_fallthru
      _
    // Predicated region
    $region46: #{tpu_custom_call.1} parent=1 // pred_check
      _
    $region47: #{tpu_custom_call.1} parent=1 // pred_check_branch
      %1075 = sbr.rel (0) target = $region49
    $region48: #{tpu_custom_call.1} parent=1 // pred_region
      _
    $region49: #{tpu_custom_call.1} parent=1 // pred_fallthru
      _
    %1076 = vsyncpa [#allocation4], 1
    %1077 = vsyncpa [#allocation6], 1

</llo_original>
